<compile_context>
chip_gen: v5e
topology: v5e:2x2
jax: 0.10.0
libtpu: 0.0.40
codegen_flags: <defaults>
</compile_context>

<pallas_src>
import jax
import jax.numpy as jnp
from jax.experimental import pallas as pl
from jax.experimental.pallas import tpu as pltpu


def channel_attention_kernel(x_ref, w1_ref, b1_ref, w2_ref, b2_ref, o_ref):
    """x_ref/o_ref: (bt, C, L); w1:(H,C), b1:(H,1), w2:(C,H), b2:(C,1) (f32)."""
    bt, _, l = x_ref.shape
    inv_l = jnp.float32(1.0 / l)

    # ---- Pooled statistics for the whole block in one vectorized pass ------
    # (bt, C, 1) columns; mean accumulates in f32, max reduces in storage dtype.
    s = jnp.sum(x_ref[...], axis=-1, keepdims=True, dtype=jnp.float32)
    m = jnp.max(x_ref[...], axis=-1, keepdims=True).astype(jnp.float32)

    # Pack into a single (C, 2*bt) operand: [avg_0..avg_{bt-1}, max_0..max_{bt-1}].
    # Each piece is already a (C, 1) column in the right (sublane, lane) layout;
    # the concatenates are a handful of cheap lane shifts on one vreg column.
    avg_cols = jnp.concatenate([s[b] for b in range(bt)], axis=1) * inv_l   # (C, bt)
    max_cols = jnp.concatenate([m[b] for b in range(bt)], axis=1)           # (C, bt)
    pooled = jnp.concatenate([avg_cols, max_cols], axis=1)                  # (C, 2*bt)

    # ---- Shared MLP, evaluated ONCE for all 2*bt pooled columns ------------
    h = jnp.dot(w1_ref[...], pooled, preferred_element_type=jnp.float32)    # (H, 2*bt)
    h = jnp.maximum(h + b1_ref[...], 0.0)
    z = jnp.dot(w2_ref[...], h, preferred_element_type=jnp.float32)         # (C, 2*bt)
    z = z + b2_ref[...]

    gate = jax.nn.sigmoid(z[:, :bt] + z[:, bt:2 * bt])                      # (C, bt)

    # ---- Apply the gate: one vectorized lane-broadcast multiply ------------
    # gate[:, b:b+1] is a (C, 1) column; stacking along a NEW leading axis is
    # layout-trivial (no lane<->sublane transpose).  Multiply in f32, cast at
    # the store only.
    gate3 = jnp.stack([gate[:, b:b + 1] for b in range(bt)], axis=0)        # (bt, C, 1)
    o_ref[...] = (gate3 * x_ref[...].astype(jnp.float32)).astype(o_ref.dtype)


def _round_up(x, m):
    return (x + m - 1) // m * m


def _padded_bytes(rows, cols, itemsize):
    """VMEM footprint of a 2-D (rows, cols) tile after (8, 128) padding."""
    return _round_up(rows, 8) * _round_up(cols, 128) * itemsize


def _num_tensorcores():
    """TensorCores per Pallas device (2 on v4 megacore / v7x, else 1)."""
    try:
        kind = jax.devices()[0].device_kind.lower()
    except Exception:
        return 1
    for tag in ("v7", "7x", "v4"):
        if tag in kind:
            return 2
    return 1


def _choose_batch_block(batch, channels, length, itemsize, num_cores,
                        x_vmem_budget=8 << 20, max_bt=16):
    """Fuse batch elements per grid step using the PADDED per-batch footprint.

    Single grid step on 1-TC parts when it fits; >= num_cores steps on
    multi-TC parts so dimension_semantics=("parallel",) has work to shard.
    """
    per_batch_pad = _padded_bytes(channels, length, itemsize)
    # in + out blocks, each double-buffered by the pipeline => 4 copies.
    bt = max(1, min(batch, max_bt, x_vmem_budget // (4 * per_batch_pad)))
    if num_cores >= 2 and batch >= 2:
        while bt > 1 and batch // bt < num_cores:
            bt -= 1
    while batch % bt:                      # kernel assumes no ragged tail
        bt -= 1
    return bt


def channel_attention(x, w1, b1, w2, b2, *, batch_block=None):
    """x: (B, C, L). w1: (H, C), b1: (H,), w2: (C, H), b2: (C,)  (PyTorch layout)."""
    B, C, L = x.shape
    H = w1.shape[0]
    assert w1.shape == (H, C) and w2.shape == (C, H)

    w1c = w1.astype(jnp.float32)
    w2c = w2.astype(jnp.float32)
    b1c = b1.reshape(H, 1).astype(jnp.float32)
    b2c = b2.reshape(C, 1).astype(jnp.float32)

    num_cores = _num_tensorcores()
    bt = batch_block if batch_block is not None else _choose_batch_block(
        B, C, L, x.dtype.itemsize, num_cores)
    grid = (B // bt,)

    # VMEM accounting uses padded footprints (L -> 128 lanes, C -> 8 sublanes).
    block_pad = bt * _padded_bytes(C, L, x.dtype.itemsize)
    weights_pad = (_padded_bytes(H, C, 4) + _padded_bytes(H, 1, 4)
                   + _padded_bytes(C, H, 4) + _padded_bytes(C, 1, 4))
    vmem_needed = 4 * block_pad + 2 * weights_pad + (2 << 20)
    vmem_limit = int(min(40 << 20, max(32 << 20, vmem_needed)))  # <= 40 MiB for v7x

    cost = pl.CostEstimate(
        flops=int(B * (8 * C * H + 3 * C * L)),
        transcendentals=int(B * C),
        bytes_accessed=int(2 * B * C * L * x.dtype.itemsize
                           + 4 * (w1c.size + w2c.size + b1c.size + b2c.size)),
    )

    return pl.pallas_call(
        channel_attention_kernel,
        out_shape=jax.ShapeDtypeStruct((B, C, L), x.dtype),
        grid_spec=pltpu.PrefetchScalarGridSpec(
            num_scalar_prefetch=0,
            grid=grid,
            in_specs=[
                pl.BlockSpec((bt, C, L), lambda i: (i, 0, 0)),   # x, bt batches/step
                pl.BlockSpec((H, C), lambda i: (0, 0)),          # W1 (constant block)
                pl.BlockSpec((H, 1), lambda i: (0, 0)),          # b1 column
                pl.BlockSpec((C, H), lambda i: (0, 0)),          # W2 (constant block)
                pl.BlockSpec((C, 1), lambda i: (0, 0)),          # b2 column
            ],
            out_specs=pl.BlockSpec((bt, C, L), lambda i: (i, 0, 0)),
        ),
        compiler_params=pltpu.CompilerParams(
            dimension_semantics=("parallel",),
            vmem_limit_bytes=vmem_limit,
        ),
        cost_estimate=cost,
    )(x, w1c, b1c, w2c, b2c)


def reference(x, w1, b1, w2, b2):
    """Pure-JAX mirror of the PyTorch module forward (PyTorch weight layout)."""
    def mlp(v):  # v: (B, C)
        h = jnp.maximum(v @ w1.T + b1.reshape(-1), 0.0)
        return h @ w2.T + b2.reshape(-1)
    weight = jax.nn.sigmoid(mlp(x.mean(-1)) + mlp(x.max(-1)))
    return weight[..., None] * x


if __name__ == "__main__":
    keys = jax.random.split(jax.random.PRNGKey(0), 10)

    # Case 1: module defaults (ratio=16 -> hidden = C // 16), zero biases as in
    # the module's __init__.  On 1-TC parts this runs as a single grid step.
    B, C, L = 2, 64, 16
    H = C // 16
    x = jax.random.normal(keys[0], (B, C, L), dtype=jnp.float32)
    w1 = jax.random.normal(keys[1], (H, C), dtype=jnp.float32) * 0.1
    b1 = jnp.zeros((H,), jnp.float32)
    w2 = jax.random.normal(keys[2], (C, H), dtype=jnp.float32) * 0.1
    b2 = jnp.zeros((C,), jnp.float32)

    out = jax.block_until_ready(channel_attention(x, w1, b1, w2, b2))
    ref = reference(x, w1, b1, w2, b2)
    assert out.shape == (B, C, L)
    assert jnp.allclose(out, ref, atol=2e-5, rtol=2e-5), "case 1 mismatch"

    # Case 2: mortal-like shape (C=128, L=34), non-zero biases; exercises the
    # batch-fused path (all 8 batch elements in one step on 1-TC parts, split
    # across steps only on multi-TC parts).
    B2, C2, L2 = 8, 128, 34
    H2 = C2 // 16
    x2 = jax.random.normal(keys[3], (B2, C2, L2), dtype=jnp.float32)
    w1_2 = jax.random.normal(keys[4], (H2, C2), dtype=jnp.float32) * 0.05
    b1_2 = jax.random.normal(keys[5], (H2,), dtype=jnp.float32) * 0.05
    w2_2 = jax.random.normal(keys[6], (C2, H2), dtype=jnp.float32) * 0.05
    b2_2 = jax.random.normal(keys[7], (C2,), dtype=jnp.float32) * 0.05

    out2 = jax.block_until_ready(channel_attention(x2, w1_2, b1_2, w2_2, b2_2))
    ref2 = reference(x2, w1_2, b1_2, w2_2, b2_2)
    assert jnp.allclose(out2, ref2, atol=2e-5, rtol=2e-5), "case 2 mismatch"

    print("KERNEL_OK")
</pallas_src>

<mosaic_0001>
module attributes {stable_mosaic.version = 11 : i64} {
  func.func @channel_attention_kernel(%arg0: i32, %arg1: memref<2x64x16xf32, #tpu.memory_space<vmem>>, %arg2: memref<4x64xf32, #tpu.memory_space<vmem>>, %arg3: memref<4x1xf32, #tpu.memory_space<vmem>>, %arg4: memref<64x4xf32, #tpu.memory_space<vmem>>, %arg5: memref<64x1xf32, #tpu.memory_space<vmem>>, %arg6: memref<2x64x16xf32, #tpu.memory_space<vmem>>) attributes {dimension_semantics = [#tpu.dimension_semantics<parallel>], iteration_bounds = array<i64: 1>, scalar_prefetch = 0 : i64, scratch_operands = 0 : i64, tpu.core_type = #tpu.core_type<tc>, window_params = [{transform_indices = @transform_0, window_bounds = array<i64: 2, 64, 16>}, {pipeline_mode = #tpu.pipeline_mode<synchronous>, transform_indices = @transform_1, window_bounds = array<i64: 4, 64>}, {pipeline_mode = #tpu.pipeline_mode<synchronous>, transform_indices = @transform_2, window_bounds = array<i64: 4, 1>}, {pipeline_mode = #tpu.pipeline_mode<synchronous>, transform_indices = @transform_3, window_bounds = array<i64: 64, 4>}, {pipeline_mode = #tpu.pipeline_mode<synchronous>, transform_indices = @transform_4, window_bounds = array<i64: 64, 1>}, {transform_indices = @transform_5, window_bounds = array<i64: 2, 64, 16>}]} {
    %c0 = arith.constant 0 : index
    %c0_0 = arith.constant 0 : index
    %c0_1 = arith.constant 0 : index
    %0 = vector.load %arg1[%c0, %c0_0, %c0_1] : memref<2x64x16xf32, #tpu.memory_space<vmem>>, vector<2x64x16xf32>
    %cst = arith.constant dense<0.000000e+00> : vector<2x64xf32>
    %1 = vector.multi_reduction <add>, %0, %cst [2] : vector<2x64x16xf32> to vector<2x64xf32>
    %2 = vector.shape_cast %1 : vector<2x64xf32> to vector<2x64x1xf32>
    %c0_2 = arith.constant 0 : index
    %c0_3 = arith.constant 0 : index
    %c0_4 = arith.constant 0 : index
    %3 = vector.load %arg1[%c0_2, %c0_3, %c0_4] : memref<2x64x16xf32, #tpu.memory_space<vmem>>, vector<2x64x16xf32>
    %cst_5 = arith.constant dense<0xFF800000> : vector<2x64xf32>
    %4 = vector.multi_reduction <maximumf>, %3, %cst_5 [2] : vector<2x64x16xf32> to vector<2x64xf32>
    %5 = vector.shape_cast %4 : vector<2x64xf32> to vector<2x64x1xf32>
    %6 = vector.extract_strided_slice %2 {offsets = [0, 0, 0], sizes = [1, 64, 1], strides = [1, 1, 1]} : vector<2x64x1xf32> to vector<1x64x1xf32>
    %7 = vector.shape_cast %6 : vector<1x64x1xf32> to vector<64x1xf32>
    %8 = vector.extract_strided_slice %2 {offsets = [1, 0, 0], sizes = [1, 64, 1], strides = [1, 1, 1]} : vector<2x64x1xf32> to vector<1x64x1xf32>
    %9 = vector.shape_cast %8 : vector<1x64x1xf32> to vector<64x1xf32>
    %10 = tpu.concatenate %7, %9 in 1 : vector<64x1xf32>, vector<64x1xf32> -> vector<64x2xf32>
    %cst_6 = arith.constant 6.250000e-02 : f32
    %11 = vector.broadcast %cst_6 : f32 to vector<64x2xf32>
    %12 = arith.mulf %10, %11 : vector<64x2xf32>
    %13 = vector.extract_strided_slice %5 {offsets = [0, 0, 0], sizes = [1, 64, 1], strides = [1, 1, 1]} : vector<2x64x1xf32> to vector<1x64x1xf32>
    %14 = vector.shape_cast %13 : vector<1x64x1xf32> to vector<64x1xf32>
    %15 = vector.extract_strided_slice %5 {offsets = [1, 0, 0], sizes = [1, 64, 1], strides = [1, 1, 1]} : vector<2x64x1xf32> to vector<1x64x1xf32>
    %16 = vector.shape_cast %15 : vector<1x64x1xf32> to vector<64x1xf32>
    %17 = tpu.concatenate %14, %16 in 1 : vector<64x1xf32>, vector<64x1xf32> -> vector<64x2xf32>
    %18 = tpu.concatenate %12, %17 in 1 : vector<64x2xf32>, vector<64x2xf32> -> vector<64x4xf32>
    %c0_7 = arith.constant 0 : index
    %c0_8 = arith.constant 0 : index
    %19 = vector.load %arg2[%c0_7, %c0_8] : memref<4x64xf32, #tpu.memory_space<vmem>>, vector<4x64xf32>
    %cst_9 = arith.constant dense<0.000000e+00> : vector<4x4xf32>
    %20 = tpu.matmul %19, %18, %cst_9 {dimension_numbers = #tpu.dot_dimension_numbers<[1], [0], [0], [1], [0, 0, 1, 1], [], []>} : vector<4x64xf32>, vector<64x4xf32>, vector<4x4xf32> -> vector<4x4xf32>
    %c0_10 = arith.constant 0 : index
    %c0_11 = arith.constant 0 : index
    %21 = vector.load %arg3[%c0_10, %c0_11] : memref<4x1xf32, #tpu.memory_space<vmem>>, vector<4x1xf32>
    %22 = vector.broadcast %21 : vector<4x1xf32> to vector<4x4xf32>
    %23 = arith.addf %20, %22 : vector<4x4xf32>
    %cst_12 = arith.constant 0.000000e+00 : f32
    %24 = vector.broadcast %cst_12 : f32 to vector<4x4xf32>
    %25 = arith.maximumf %23, %24 : vector<4x4xf32>
    %c0_13 = arith.constant 0 : index
    %c0_14 = arith.constant 0 : index
    %26 = vector.load %arg4[%c0_13, %c0_14] : memref<64x4xf32, #tpu.memory_space<vmem>>, vector<64x4xf32>
    %cst_15 = arith.constant dense<0.000000e+00> : vector<64x4xf32>
    %27 = tpu.matmul %26, %25, %cst_15 {dimension_numbers = #tpu.dot_dimension_numbers<[1], [0], [0], [1], [0, 0, 1, 1], [], []>} : vector<64x4xf32>, vector<4x4xf32>, vector<64x4xf32> -> vector<64x4xf32>
    %c0_16 = arith.constant 0 : index
    %c0_17 = arith.constant 0 : index
    %28 = vector.load %arg5[%c0_16, %c0_17] : memref<64x1xf32, #tpu.memory_space<vmem>>, vector<64x1xf32>
    %29 = vector.broadcast %28 : vector<64x1xf32> to vector<64x4xf32>
    %30 = arith.addf %27, %29 : vector<64x4xf32>
    %31 = vector.extract_strided_slice %30 {offsets = [0, 0], sizes = [64, 2], strides = [1, 1]} : vector<64x4xf32> to vector<64x2xf32>
    %32 = vector.extract_strided_slice %30 {offsets = [0, 2], sizes = [64, 2], strides = [1, 1]} : vector<64x4xf32> to vector<64x2xf32>
    %33 = arith.addf %31, %32 : vector<64x2xf32>
    %34 = arith.negf %33 : vector<64x2xf32>
    %35 = math.exp %34 : vector<64x2xf32>
    %cst_18 = arith.constant 1.000000e+00 : f32
    %36 = vector.broadcast %cst_18 : f32 to vector<64x2xf32>
    %37 = arith.addf %36, %35 : vector<64x2xf32>
    %38 = arith.divf %36, %37 : vector<64x2xf32>
    %39 = vector.extract_strided_slice %38 {offsets = [0, 0], sizes = [64, 1], strides = [1, 1]} : vector<64x2xf32> to vector<64x1xf32>
    %40 = vector.extract_strided_slice %38 {offsets = [0, 1], sizes = [64, 1], strides = [1, 1]} : vector<64x2xf32> to vector<64x1xf32>
    %41 = vector.shape_cast %39 : vector<64x1xf32> to vector<1x64x1xf32>
    %42 = vector.shape_cast %40 : vector<64x1xf32> to vector<1x64x1xf32>
    %43 = tpu.concatenate %41, %42 in 0 : vector<1x64x1xf32>, vector<1x64x1xf32> -> vector<2x64x1xf32>
    %c0_19 = arith.constant 0 : index
    %c0_20 = arith.constant 0 : index
    %c0_21 = arith.constant 0 : index
    %44 = vector.load %arg1[%c0_19, %c0_20, %c0_21] : memref<2x64x16xf32, #tpu.memory_space<vmem>>, vector<2x64x16xf32>
    %45 = vector.broadcast %43 : vector<2x64x1xf32> to vector<2x64x16xf32>
    %46 = arith.mulf %45, %44 : vector<2x64x16xf32>
    %c0_22 = arith.constant 0 : index
    %c0_23 = arith.constant 0 : index
    %c0_24 = arith.constant 0 : index
    %47 = vector.load %arg6[%c0_22, %c0_23, %c0_24] : memref<2x64x16xf32, #tpu.memory_space<vmem>>, vector<2x64x16xf32>
    tpu.vector_store %arg6[%c0_22, %c0_23, %c0_24], %46 {strides = array<i32>} : memref<2x64x16xf32, #tpu.memory_space<vmem>>, vector<2x64x16xf32>,
    return
  }
  func.func @transform_0(%arg0: i32) -> (i32, i32, i32) {
    %c0_i32 = arith.constant 0 : i32
    %c0_i32_0 = arith.constant 0 : i32
    %c0_i32_1 = arith.constant 0 : i32
    return %arg0, %c0_i32, %c0_i32_0 : i32, i32, i32
  }
  func.func @transform_1(%arg0: i32) -> (i32, i32) {
    %c0_i32 = arith.constant 0 : i32
    %c0_i32_0 = arith.constant 0 : i32
    %c0_i32_1 = arith.constant 0 : i32
    return %c0_i32, %c0_i32_0 : i32, i32
  }
  func.func @transform_2(%arg0: i32) -> (i32, i32) {
    %c0_i32 = arith.constant 0 : i32
    %c0_i32_0 = arith.constant 0 : i32
    %c0_i32_1 = arith.constant 0 : i32
    return %c0_i32, %c0_i32_0 : i32, i32
  }
  func.func @transform_3(%arg0: i32) -> (i32, i32) {
    %c0_i32 = arith.constant 0 : i32
    %c0_i32_0 = arith.constant 0 : i32
    %c0_i32_1 = arith.constant 0 : i32
    return %c0_i32, %c0_i32_0 : i32, i32
  }
  func.func @transform_4(%arg0: i32) -> (i32, i32) {
    %c0_i32 = arith.constant 0 : i32
    %c0_i32_0 = arith.constant 0 : i32
    %c0_i32_1 = arith.constant 0 : i32
    return %c0_i32, %c0_i32_0 : i32, i32
  }
  func.func @transform_5(%arg0: i32) -> (i32, i32, i32) {
    %c0_i32 = arith.constant 0 : i32
    %c0_i32_0 = arith.constant 0 : i32
    %c0_i32_1 = arith.constant 0 : i32
    return %arg0, %c0_i32, %c0_i32_0 : i32, i32, i32
  }
}

</mosaic_0001>

<llo_original>
// kernel: tpu_custom_call.1
$region0: #{tpu_custom_call.1}
  #allocation0 [shape = 'u32[]', space=smem, size = 0x4, offset = 0x4, fixed_abs, tag = 'smem constant byte address 0x4 - core index']
  #allocation1 [shape = 'u32[72,128]{1,0:T(1,128)}', space=vmem, size = 0x9000, scoped, tag = 'internal scratch']
  %s0 = inlined_call_operand.vmem [shape: f32[2,64,16], index: 0, kind: input, shape index: {}]
  %s1 = inlined_call_operand.vmem [shape: f32[4,64], index: 1, kind: input, shape index: {}]
  %s2 = inlined_call_operand.vmem [shape: f32[4,1], index: 2, kind: input, shape index: {}]
  %s3 = inlined_call_operand.vmem [shape: f32[64,4], index: 3, kind: input, shape index: {}]
  %s4 = inlined_call_operand.vmem [shape: f32[64,1], index: 4, kind: input, shape index: {}]
  %s5 = inlined_call_operand.vmem [shape: f32[2,64,16], index: 5, kind: output, shape index: {}]
  %s6 = sld [smem:[#allocation0]]
  $region30: #{tpu_custom_call.1} parent=0
    _
  %s8 = ssub.s32 1, %s6
  %s9 = scalar_select 0, %s8, %s6
  // Predicated region
  $region2: #{tpu_custom_call.1} parent=0 // pred_check
    _
  $region3: #{tpu_custom_call.1} parent=0 // pred_check_branch
    %11 = sbr.rel (0) target = $region5
  $region4: #{tpu_custom_call.1} parent=0 // pred_region
    _
  $region5: #{tpu_custom_call.1} parent=0 // pred_fallthru
    _
  // Predicated region
  $region6: #{tpu_custom_call.1} parent=0 // pred_check
    _
  $region7: #{tpu_custom_call.1} parent=0 // pred_check_branch
    %13 = sbr.rel (0) target = $region9
  $region8: #{tpu_custom_call.1} parent=0 // pred_region
    _
  $region9: #{tpu_custom_call.1} parent=0 // pred_fallthru
    _
  // Predicated region
  $region10: #{tpu_custom_call.1} parent=0 // pred_check
    _
  $region11: #{tpu_custom_call.1} parent=0 // pred_check_branch
    %15 = sbr.rel (0) target = $region13
  $region12: #{tpu_custom_call.1} parent=0 // pred_region
    _
  $region13: #{tpu_custom_call.1} parent=0 // pred_fallthru
    _
  // Predicated region
  $region14: #{tpu_custom_call.1} parent=0 // pred_check
    _
  $region15: #{tpu_custom_call.1} parent=0 // pred_check_branch
    %17 = sbr.rel (0) target = $region17
  $region16: #{tpu_custom_call.1} parent=0 // pred_region
    _
  $region17: #{tpu_custom_call.1} parent=0 // pred_fallthru
    _
  // Predicated region
  $region18: #{tpu_custom_call.1} parent=0 // pred_check
    _
  $region19: #{tpu_custom_call.1} parent=0 // pred_check_branch
    %19 = sbr.rel (0) target = $region21
  $region20: #{tpu_custom_call.1} parent=0 // pred_region
    _
  $region21: #{tpu_custom_call.1} parent=0 // pred_fallthru
    _
  %v20 = vld [vmem:[%s0] sm:$0xff]
  %v21 = vld [vmem:[%s0 + $0x8] sm:$0xff]
  %v22 = vld [vmem:[%s0 + $0x10] sm:$0xff]
  %v23 = vld [vmem:[%s0 + $0x18] sm:$0xff]
  %v24 = vld [vmem:[%s0 + $0x20] sm:$0xff]
  %v25 = vld [vmem:[%s0 + $0x28] sm:$0xff]
  %v26 = vld [vmem:[%s0 + $0x30] sm:$0xff]
  %v27 = vld [vmem:[%s0 + $0x38] sm:$0xff]
  %v28 = vld [vmem:[%s0 + $0x40] sm:$0xff]
  %v29 = vld [vmem:[%s0 + $0x48] sm:$0xff]
  %v30 = vld [vmem:[%s0 + $0x50] sm:$0xff]
  %v31 = vld [vmem:[%s0 + $0x58] sm:$0xff]
  %v32 = vld [vmem:[%s0 + $0x60] sm:$0xff]
  %v33 = vld [vmem:[%s0 + $0x68] sm:$0xff]
  %v34 = vld [vmem:[%s0 + $0x70] sm:$0xff]
  %v35 = vld [vmem:[%s0 + $0x78] sm:$0xff]
  %vm36 = vcmask 130048
  %v37 = vsel %vm36, %v20, 0.0
  %38 = vadd.xlane.f32.xlu0 %v37
  %v39 = vpop.xlane.xlu0 %38
  %v40 = vsel %vm36, %v21, 0.0
  %41 = vadd.xlane.f32.xlu0 %v40
  %v42 = vpop.xlane.xlu0 %41
  %v43 = vsel %vm36, %v22, 0.0
  %44 = vadd.xlane.f32.xlu0 %v43
  %v45 = vpop.xlane.xlu0 %44
  %v46 = vsel %vm36, %v23, 0.0
  %47 = vadd.xlane.f32.xlu0 %v46
  %v48 = vpop.xlane.xlu0 %47
  %v49 = vsel %vm36, %v24, 0.0
  %50 = vadd.xlane.f32.xlu0 %v49
  %v51 = vpop.xlane.xlu0 %50
  %v52 = vsel %vm36, %v25, 0.0
  %53 = vadd.xlane.f32.xlu0 %v52
  %v54 = vpop.xlane.xlu0 %53
  %v55 = vsel %vm36, %v26, 0.0
  %56 = vadd.xlane.f32.xlu0 %v55
  %v57 = vpop.xlane.xlu0 %56
  %v58 = vsel %vm36, %v27, 0.0
  %59 = vadd.xlane.f32.xlu0 %v58
  %v60 = vpop.xlane.xlu0 %59
  %v61 = vsel %vm36, %v28, 0.0
  %62 = vadd.xlane.f32.xlu0 %v61
  %v63 = vpop.xlane.xlu0 %62
  %v64 = vsel %vm36, %v29, 0.0
  %65 = vadd.xlane.f32.xlu0 %v64
  %v66 = vpop.xlane.xlu0 %65
  %v67 = vsel %vm36, %v30, 0.0
  %68 = vadd.xlane.f32.xlu0 %v67
  %v69 = vpop.xlane.xlu0 %68
  %v70 = vsel %vm36, %v31, 0.0
  %71 = vadd.xlane.f32.xlu0 %v70
  %v72 = vpop.xlane.xlu0 %71
  %v73 = vsel %vm36, %v32, 0.0
  %74 = vadd.xlane.f32.xlu0 %v73
  %v75 = vpop.xlane.xlu0 %74
  %v76 = vsel %vm36, %v33, 0.0
  %77 = vadd.xlane.f32.xlu0 %v76
  %v78 = vpop.xlane.xlu0 %77
  %v79 = vsel %vm36, %v34, 0.0
  %80 = vadd.xlane.f32.xlu0 %v79
  %v81 = vpop.xlane.xlu0 %80
  %v82 = vsel %vm36, %v35, 0.0
  %83 = vadd.xlane.f32.xlu0 %v82
  %v84 = vpop.xlane.xlu0 %83
  %v85 = vsel %vm36, %v20, -inf
  %86 = vmax.xlane.f32.xlu0 %v85
  %v87 = vpop.xlane.xlu0 %86
  %v88 = vsel %vm36, %v21, -inf
  %89 = vmax.xlane.f32.xlu0 %v88
  %v90 = vpop.xlane.xlu0 %89
  %v91 = vsel %vm36, %v22, -inf
  %92 = vmax.xlane.f32.xlu0 %v91
  %v93 = vpop.xlane.xlu0 %92
  %v94 = vsel %vm36, %v23, -inf
  %95 = vmax.xlane.f32.xlu0 %v94
  %v96 = vpop.xlane.xlu0 %95
  %v97 = vsel %vm36, %v24, -inf
  %98 = vmax.xlane.f32.xlu0 %v97
  %v99 = vpop.xlane.xlu0 %98
  %v100 = vsel %vm36, %v25, -inf
  %101 = vmax.xlane.f32.xlu0 %v100
  %v102 = vpop.xlane.xlu0 %101
  %v103 = vsel %vm36, %v26, -inf
  %104 = vmax.xlane.f32.xlu0 %v103
  %v105 = vpop.xlane.xlu0 %104
  %v106 = vsel %vm36, %v27, -inf
  %107 = vmax.xlane.f32.xlu0 %v106
  %v108 = vpop.xlane.xlu0 %107
  %v109 = vsel %vm36, %v28, -inf
  %110 = vmax.xlane.f32.xlu0 %v109
  %v111 = vpop.xlane.xlu0 %110
  %v112 = vsel %vm36, %v29, -inf
  %113 = vmax.xlane.f32.xlu0 %v112
  %v114 = vpop.xlane.xlu0 %113
  %v115 = vsel %vm36, %v30, -inf
  %116 = vmax.xlane.f32.xlu0 %v115
  %v117 = vpop.xlane.xlu0 %116
  %v118 = vsel %vm36, %v31, -inf
  %119 = vmax.xlane.f32.xlu0 %v118
  %v120 = vpop.xlane.xlu0 %119
  %v121 = vsel %vm36, %v32, -inf
  %122 = vmax.xlane.f32.xlu0 %v121
  %v123 = vpop.xlane.xlu0 %122
  %v124 = vsel %vm36, %v33, -inf
  %125 = vmax.xlane.f32.xlu0 %v124
  %v126 = vpop.xlane.xlu0 %125
  %v127 = vsel %vm36, %v34, -inf
  %128 = vmax.xlane.f32.xlu0 %v127
  %v129 = vpop.xlane.xlu0 %128
  %v130 = vsel %vm36, %v35, -inf
  %131 = vmax.xlane.f32.xlu0 %v130
  %v132 = vpop.xlane.xlu0 %131
  %vm133 = vcmask 7168
  %v134 = vsel %vm133, %v39, %v63
  %v135 = vsel %vm133, %v42, %v66
  %v136 = vsel %vm133, %v45, %v69
  %v137 = vsel %vm133, %v48, %v72
  %v138 = vsel %vm133, %v51, %v75
  %v139 = vsel %vm133, %v54, %v78
  %v140 = vsel %vm133, %v57, %v81
  %v141 = vsel %vm133, %v60, %v84
  %v142 = vmul.f32 %v134, 0.0625
  %v143 = vmul.f32 %v135, 0.0625
  %v144 = vmul.f32 %v136, 0.0625
  %v145 = vmul.f32 %v137, 0.0625
  %v146 = vmul.f32 %v138, 0.0625
  %v147 = vmul.f32 %v139, 0.0625
  %v148 = vmul.f32 %v140, 0.0625
  %v149 = vmul.f32 %v141, 0.0625
  %v150 = vsel %vm133, %v87, %v111
  %v151 = vsel %vm133, %v90, %v114
  %v152 = vsel %vm133, %v93, %v117
  %v153 = vsel %vm133, %v96, %v120
  %v154 = vsel %vm133, %v99, %v123
  %v155 = vsel %vm133, %v102, %v126
  %v156 = vsel %vm133, %v105, %v129
  %v157 = vsel %vm133, %v108, %v132
  %166 = vrot.lane.b32.xlu0 %v150, 2
  %v167 = vpop.permute.xlu0 %166
  %168 = vrot.lane.b32.xlu0 %v151, 2
  %v169 = vpop.permute.xlu0 %168
  %170 = vrot.lane.b32.xlu0 %v152, 2
  %v171 = vpop.permute.xlu0 %170
  %172 = vrot.lane.b32.xlu0 %v153, 2
  %v173 = vpop.permute.xlu0 %172
  %174 = vrot.lane.b32.xlu0 %v154, 2
  %v175 = vpop.permute.xlu0 %174
  %176 = vrot.lane.b32.xlu0 %v155, 2
  %v177 = vpop.permute.xlu0 %176
  %178 = vrot.lane.b32.xlu0 %v156, 2
  %v179 = vpop.permute.xlu0 %178
  %180 = vrot.lane.b32.xlu0 %v157, 2
  %v181 = vpop.permute.xlu0 %180
  %vm190 = vcmask 15360
  %v191 = vsel %vm190, %v142, %v167
  %v192 = vsel %vm190, %v143, %v169
  %v193 = vsel %vm190, %v144, %v171
  %v194 = vsel %vm190, %v145, %v173
  %v195 = vsel %vm190, %v146, %v175
  %v196 = vsel %vm190, %v147, %v177
  %v197 = vsel %vm190, %v148, %v179
  %v198 = vsel %vm190, %v149, %v181
  %v199 = vld [vmem:[%s1] sm:$0xf]
  %v200 = vld [vmem:[%s2] sm:$0xf]
  %202 = vset.pattern.permute.xlu0 0
  %203 = vperm.xlu0 %202, %v200
  %v204 = vpop.permute.xlu0 %203
  %vm206 = vcmask 523264
  %v208 = vsel %vm206, %v199, 0
  %210 = vmatpush.msra.mxu0 0.0
  %211 = vmatpush.msra.mxu0 0.0
  %212 = vmatpush.msra.mxu0 0.0
  %213 = vmatpush.msra.mxu0 0.0
  %214 = vmatpush.msra.mxu0 0.0
  %215 = vmatpush.msra.mxu0 0.0
  %216 = vmatpush.msra.mxu0 0.0
  %217 = vmatpush.msra.mxu0 0.0
  %218 = vmatpush.msra.mxu0 %v198
  %219 = vmatpush.msra.mxu0 %v197
  %220 = vmatpush.msra.mxu0 %v196
  %221 = vmatpush.msra.mxu0 %v195
  %222 = vmatpush.msra.mxu0 %v194
  %223 = vmatpush.msra.mxu0 %v193
  %224 = vmatpush.msra.mxu0 %v192
  %225 = vmatpush.msra.mxu0 %v191
  %226 = vmatmul.f32.gmra.mxu0 %v208
  %v227 = vpop.f32.mrf.mxu0
  %v228 = vadd.f32 %v204, %v227
  %229 = vdwg.mxu0
  %v230 = vmax.f32 %v228, 0.0
  %v231 = vld [vmem:[%s3] sm:$0xff]
  %v232 = vld [vmem:[%s3 + $0x8] sm:$0xff]
  %v233 = vld [vmem:[%s3 + $0x10] sm:$0xff]
  %v234 = vld [vmem:[%s3 + $0x18] sm:$0xff]
  %v235 = vld [vmem:[%s3 + $0x20] sm:$0xff]
  %v236 = vld [vmem:[%s3 + $0x28] sm:$0xff]
  %v237 = vld [vmem:[%s3 + $0x30] sm:$0xff]
  %v238 = vld [vmem:[%s3 + $0x38] sm:$0xff]
  %v239 = vld [vmem:[%s4] sm:$0xff]
  %v240 = vld [vmem:[%s4 + $0x8] sm:$0xff]
  %v241 = vld [vmem:[%s4 + $0x10] sm:$0xff]
  %v242 = vld [vmem:[%s4 + $0x18] sm:$0xff]
  %v243 = vld [vmem:[%s4 + $0x20] sm:$0xff]
  %v244 = vld [vmem:[%s4 + $0x28] sm:$0xff]
  %v245 = vld [vmem:[%s4 + $0x30] sm:$0xff]
  %v246 = vld [vmem:[%s4 + $0x38] sm:$0xff]
  %248 = vset.pattern.permute.xlu0 0
  %249 = vperm.xlu0 %248, %v239
  %v250 = vpop.permute.xlu0 %249
  %253 = vset.pattern.permute.xlu0 0
  %254 = vperm.xlu0 %253, %v240
  %v255 = vpop.permute.xlu0 %254
  %258 = vset.pattern.permute.xlu0 0
  %259 = vperm.xlu0 %258, %v241
  %v260 = vpop.permute.xlu0 %259
  %263 = vset.pattern.permute.xlu0 0
  %264 = vperm.xlu0 %263, %v242
  %v265 = vpop.permute.xlu0 %264
  %268 = vset.pattern.permute.xlu0 0
  %269 = vperm.xlu0 %268, %v243
  %v270 = vpop.permute.xlu0 %269
  %273 = vset.pattern.permute.xlu0 0
  %274 = vperm.xlu0 %273, %v244
  %v275 = vpop.permute.xlu0 %274
  %278 = vset.pattern.permute.xlu0 0
  %279 = vperm.xlu0 %278, %v245
  %v280 = vpop.permute.xlu0 %279
  %283 = vset.pattern.permute.xlu0 0
  %284 = vperm.xlu0 %283, %v246
  %v285 = vpop.permute.xlu0 %284
  %vm287 = vcmask 31744
  %v289 = vsel %vm287, %v231, 0
  %v292 = vsel %vm287, %v232, 0
  %v295 = vsel %vm287, %v233, 0
  %v298 = vsel %vm287, %v234, 0
  %v301 = vsel %vm287, %v235, 0
  %v304 = vsel %vm287, %v236, 0
  %v307 = vsel %vm287, %v237, 0
  %v310 = vsel %vm287, %v238, 0
  %vm312 = vcmask 1043456
  %v314 = vsel %vm312, %v230, 0
  %316 = vmatpush.msra.mxu0 0.0
  %317 = vmatpush.msra.mxu0 0.0
  %318 = vmatpush.msra.mxu0 0.0
  %319 = vmatpush.msra.mxu0 0.0
  %320 = vmatpush.msra.mxu0 0.0
  %321 = vmatpush.msra.mxu0 0.0
  %322 = vmatpush.msra.mxu0 0.0
  %323 = vmatpush.msra.mxu0 0.0
  %324 = vmatpush.msra.mxu0 0.0
  %325 = vmatpush.msra.mxu0 0.0
  %326 = vmatpush.msra.mxu0 0.0
  %327 = vmatpush.msra.mxu0 0.0
  %328 = vmatpush.msra.mxu0 0.0
  %329 = vmatpush.msra.mxu0 0.0
  %330 = vmatpush.msra.mxu0 0.0
  %331 = vmatpush.msra.mxu0 %v314
  %332 = vmatmul.f32.gmra.mxu0 %v289
  %v333 = vpop.f32.mrf.mxu0
  %v334 = vadd.f32 %v250, %v333
  %335 = vmatmul.f32.gmra.mxu0 %v292
  %v336 = vpop.f32.mrf.mxu0
  %v337 = vadd.f32 %v255, %v336
  %338 = vmatmul.f32.gmra.mxu0 %v295
  %v339 = vpop.f32.mrf.mxu0
  %v340 = vadd.f32 %v260, %v339
  %341 = vmatmul.f32.gmra.mxu0 %v298
  %v342 = vpop.f32.mrf.mxu0
  %v343 = vadd.f32 %v265, %v342
  %344 = vmatmul.f32.gmra.mxu0 %v301
  %v345 = vpop.f32.mrf.mxu0
  %v346 = vadd.f32 %v270, %v345
  %347 = vmatmul.f32.gmra.mxu0 %v304
  %v348 = vpop.f32.mrf.mxu0
  %v349 = vadd.f32 %v275, %v348
  %350 = vmatmul.f32.gmra.mxu0 %v307
  %v351 = vpop.f32.mrf.mxu0
  %v352 = vadd.f32 %v280, %v351
  %353 = vmatmul.f32.gmra.mxu0 %v310
  %v354 = vpop.f32.mrf.mxu0
  %v355 = vadd.f32 %v285, %v354
  %356 = vdwg.mxu0
  %365 = vrot.lane.b32.xlu0 %v334, 126
  %v366 = vpop.permute.xlu0 %365
  %367 = vrot.lane.b32.xlu0 %v337, 126
  %v368 = vpop.permute.xlu0 %367
  %369 = vrot.lane.b32.xlu0 %v340, 126
  %v370 = vpop.permute.xlu0 %369
  %371 = vrot.lane.b32.xlu0 %v343, 126
  %v372 = vpop.permute.xlu0 %371
  %373 = vrot.lane.b32.xlu0 %v346, 126
  %v374 = vpop.permute.xlu0 %373
  %375 = vrot.lane.b32.xlu0 %v349, 126
  %v376 = vpop.permute.xlu0 %375
  %377 = vrot.lane.b32.xlu0 %v352, 126
  %v378 = vpop.permute.xlu0 %377
  %379 = vrot.lane.b32.xlu0 %v355, 126
  %v380 = vpop.permute.xlu0 %379
  %v389 = vadd.f32 %v334, %v366
  %v390 = vadd.f32 %v337, %v368
  %v391 = vadd.f32 %v340, %v370
  %v392 = vadd.f32 %v343, %v372
  %v393 = vadd.f32 %v346, %v374
  %v394 = vadd.f32 %v349, %v376
  %v395 = vadd.f32 %v352, %v378
  %v396 = vadd.f32 %v355, %v380
  %v397 = vxor.u32 %v389, 2147483648
  %v398 = vxor.u32 %v390, 2147483648
  %v399 = vxor.u32 %v391, 2147483648
  %v400 = vxor.u32 %v392, 2147483648
  %v401 = vxor.u32 %v393, 2147483648
  %v402 = vxor.u32 %v394, 2147483648
  %v403 = vxor.u32 %v395, 2147483648
  %v404 = vxor.u32 %v396, 2147483648
  %v405 = vmul.f32 %v397, 1.442695
  %v406 = vpow.pop %v405
  %v407 = vmul.f32 %v398, 1.442695
  %v408 = vpow.pop %v407
  %v409 = vmul.f32 %v399, 1.442695
  %v410 = vpow.pop %v409
  %v411 = vmul.f32 %v400, 1.442695
  %v412 = vpow.pop %v411
  %v413 = vmul.f32 %v401, 1.442695
  %v414 = vpow.pop %v413
  %v415 = vmul.f32 %v402, 1.442695
  %v416 = vpow.pop %v415
  %v417 = vmul.f32 %v403, 1.442695
  %v418 = vpow.pop %v417
  %v419 = vmul.f32 %v404, 1.442695
  %v420 = vpow.pop %v419
  %v421 = vadd.f32 %v406, 1.0
  %v422 = vadd.f32 %v408, 1.0
  %v423 = vadd.f32 %v410, 1.0
  %v424 = vadd.f32 %v412, 1.0
  %v425 = vadd.f32 %v414, 1.0
  %v426 = vadd.f32 %v416, 1.0
  %v427 = vadd.f32 %v418, 1.0
  %v428 = vadd.f32 %v420, 1.0
  %v429 = vrcp.pop %v421
  %v430 = vmul.f32 %v421, %v429
  %v431 = vsub.f32 1.0, %v430
  %v432 = vmul.f32 %v429, %v431
  %v433 = vadd.f32 %v429, %v432
  %vm434 = vweird.f32 %v421
  %vm435 = vweird.f32 %v429
  %vm436 = vmor %vm434, %vm435
  %v437 = vsel %vm436, %v429, %v433
  %v438 = vand.u32 2147483647, %v421
  %vm439 = vcmp.eq.f32.partialorder %v438, 8.507059e+37
  %v440 = vand.u32 %v421, 2147483648
  %v441 = vor.u32 1.1754944e-38, %v440
  %v442 = vsel %vm439, %v441, %v437
  %v443 = vmul.f32 1.0, %v442
  %v444 = vrcp.pop %v422
  %v445 = vmul.f32 %v422, %v444
  %v446 = vsub.f32 1.0, %v445
  %v447 = vmul.f32 %v444, %v446
  %v448 = vadd.f32 %v444, %v447
  %vm449 = vweird.f32 %v422
  %vm450 = vweird.f32 %v444
  %vm451 = vmor %vm449, %vm450
  %v452 = vsel %vm451, %v444, %v448
  %v453 = vand.u32 2147483647, %v422
  %vm454 = vcmp.eq.f32.partialorder %v453, 8.507059e+37
  %v455 = vand.u32 %v422, 2147483648
  %v456 = vor.u32 1.1754944e-38, %v455
  %v457 = vsel %vm454, %v456, %v452
  %v458 = vmul.f32 1.0, %v457
  %v459 = vrcp.pop %v423
  %v460 = vmul.f32 %v423, %v459
  %v461 = vsub.f32 1.0, %v460
  %v462 = vmul.f32 %v459, %v461
  %v463 = vadd.f32 %v459, %v462
  %vm464 = vweird.f32 %v423
  %vm465 = vweird.f32 %v459
  %vm466 = vmor %vm464, %vm465
  %v467 = vsel %vm466, %v459, %v463
  %v468 = vand.u32 2147483647, %v423
  %vm469 = vcmp.eq.f32.partialorder %v468, 8.507059e+37
  %v470 = vand.u32 %v423, 2147483648
  %v471 = vor.u32 1.1754944e-38, %v470
  %v472 = vsel %vm469, %v471, %v467
  %v473 = vmul.f32 1.0, %v472
  %v474 = vrcp.pop %v424
  %v475 = vmul.f32 %v424, %v474
  %v476 = vsub.f32 1.0, %v475
  %v477 = vmul.f32 %v474, %v476
  %v478 = vadd.f32 %v474, %v477
  %vm479 = vweird.f32 %v424
  %vm480 = vweird.f32 %v474
  %vm481 = vmor %vm479, %vm480
  %v482 = vsel %vm481, %v474, %v478
  %v483 = vand.u32 2147483647, %v424
  %vm484 = vcmp.eq.f32.partialorder %v483, 8.507059e+37
  %v485 = vand.u32 %v424, 2147483648
  %v486 = vor.u32 1.1754944e-38, %v485
  %v487 = vsel %vm484, %v486, %v482
  %v488 = vmul.f32 1.0, %v487
  %v489 = vrcp.pop %v425
  %v490 = vmul.f32 %v425, %v489
  %v491 = vsub.f32 1.0, %v490
  %v492 = vmul.f32 %v489, %v491
  %v493 = vadd.f32 %v489, %v492
  %vm494 = vweird.f32 %v425
  %vm495 = vweird.f32 %v489
  %vm496 = vmor %vm494, %vm495
  %v497 = vsel %vm496, %v489, %v493
  %v498 = vand.u32 2147483647, %v425
  %vm499 = vcmp.eq.f32.partialorder %v498, 8.507059e+37
  %v500 = vand.u32 %v425, 2147483648
  %v501 = vor.u32 1.1754944e-38, %v500
  %v502 = vsel %vm499, %v501, %v497
  %v503 = vmul.f32 1.0, %v502
  %v504 = vrcp.pop %v426
  %v505 = vmul.f32 %v426, %v504
  %v506 = vsub.f32 1.0, %v505
  %v507 = vmul.f32 %v504, %v506
  %v508 = vadd.f32 %v504, %v507
  %vm509 = vweird.f32 %v426
  %vm510 = vweird.f32 %v504
  %vm511 = vmor %vm509, %vm510
  %v512 = vsel %vm511, %v504, %v508
  %v513 = vand.u32 2147483647, %v426
  %vm514 = vcmp.eq.f32.partialorder %v513, 8.507059e+37
  %v515 = vand.u32 %v426, 2147483648
  %v516 = vor.u32 1.1754944e-38, %v515
  %v517 = vsel %vm514, %v516, %v512
  %v518 = vmul.f32 1.0, %v517
  %v519 = vrcp.pop %v427
  %v520 = vmul.f32 %v427, %v519
  %v521 = vsub.f32 1.0, %v520
  %v522 = vmul.f32 %v519, %v521
  %v523 = vadd.f32 %v519, %v522
  %vm524 = vweird.f32 %v427
  %vm525 = vweird.f32 %v519
  %vm526 = vmor %vm524, %vm525
  %v527 = vsel %vm526, %v519, %v523
  %v528 = vand.u32 2147483647, %v427
  %vm529 = vcmp.eq.f32.partialorder %v528, 8.507059e+37
  %v530 = vand.u32 %v427, 2147483648
  %v531 = vor.u32 1.1754944e-38, %v530
  %v532 = vsel %vm529, %v531, %v527
  %v533 = vmul.f32 1.0, %v532
  %v534 = vrcp.pop %v428
  %v535 = vmul.f32 %v428, %v534
  %v536 = vsub.f32 1.0, %v535
  %v537 = vmul.f32 %v534, %v536
  %v538 = vadd.f32 %v534, %v537
  %vm539 = vweird.f32 %v428
  %vm540 = vweird.f32 %v534
  %vm541 = vmor %vm539, %vm540
  %v542 = vsel %vm541, %v534, %v538
  %v543 = vand.u32 2147483647, %v428
  %vm544 = vcmp.eq.f32.partialorder %v543, 8.507059e+37
  %v545 = vand.u32 %v428, 2147483648
  %v546 = vor.u32 1.1754944e-38, %v545
  %v547 = vsel %vm544, %v546, %v542
  %v548 = vmul.f32 1.0, %v547
  %557 = vrot.lane.b32.xlu0 %v443, 127
  %v558 = vpop.permute.xlu0 %557
  %559 = vrot.lane.b32.xlu0 %v458, 127
  %v560 = vpop.permute.xlu0 %559
  %561 = vrot.lane.b32.xlu0 %v473, 127
  %v562 = vpop.permute.xlu0 %561
  %563 = vrot.lane.b32.xlu0 %v488, 127
  %v564 = vpop.permute.xlu0 %563
  %565 = vrot.lane.b32.xlu0 %v503, 127
  %v566 = vpop.permute.xlu0 %565
  %567 = vrot.lane.b32.xlu0 %v518, 127
  %v568 = vpop.permute.xlu0 %567
  %569 = vrot.lane.b32.xlu0 %v533, 127
  %v570 = vpop.permute.xlu0 %569
  %571 = vrot.lane.b32.xlu0 %v548, 127
  %v572 = vpop.permute.xlu0 %571
  %573 = vset.pattern.permute.xlu0 0
  %574 = vperm.xlu0 %573, %v443
  %v575 = vpop.permute.xlu0 %574
  %577 = vset.pattern.permute.xlu0 0
  %578 = vperm.xlu0 %577, %v458
  %v579 = vpop.permute.xlu0 %578
  %581 = vset.pattern.permute.xlu0 0
  %582 = vperm.xlu0 %581, %v473
  %v583 = vpop.permute.xlu0 %582
  %585 = vset.pattern.permute.xlu0 0
  %586 = vperm.xlu0 %585, %v488
  %v587 = vpop.permute.xlu0 %586
  %589 = vset.pattern.permute.xlu0 0
  %590 = vperm.xlu0 %589, %v503
  %v591 = vpop.permute.xlu0 %590
  %593 = vset.pattern.permute.xlu0 0
  %594 = vperm.xlu0 %593, %v518
  %v595 = vpop.permute.xlu0 %594
  %597 = vset.pattern.permute.xlu0 0
  %598 = vperm.xlu0 %597, %v533
  %v599 = vpop.permute.xlu0 %598
  %601 = vset.pattern.permute.xlu0 0
  %602 = vperm.xlu0 %601, %v548
  %v603 = vpop.permute.xlu0 %602
  %605 = vset.pattern.permute.xlu0 0
  %606 = vperm.xlu0 %605, %v558
  %v607 = vpop.permute.xlu0 %606
  %609 = vset.pattern.permute.xlu0 0
  %610 = vperm.xlu0 %609, %v560
  %v611 = vpop.permute.xlu0 %610
  %613 = vset.pattern.permute.xlu0 0
  %614 = vperm.xlu0 %613, %v562
  %v615 = vpop.permute.xlu0 %614
  %617 = vset.pattern.permute.xlu0 0
  %618 = vperm.xlu0 %617, %v564
  %v619 = vpop.permute.xlu0 %618
  %621 = vset.pattern.permute.xlu0 0
  %622 = vperm.xlu0 %621, %v566
  %v623 = vpop.permute.xlu0 %622
  %625 = vset.pattern.permute.xlu0 0
  %626 = vperm.xlu0 %625, %v568
  %v627 = vpop.permute.xlu0 %626
  %629 = vset.pattern.permute.xlu0 0
  %630 = vperm.xlu0 %629, %v570
  %v631 = vpop.permute.xlu0 %630
  %633 = vset.pattern.permute.xlu0 0
  %634 = vperm.xlu0 %633, %v572
  %v635 = vpop.permute.xlu0 %634
  %v637 = vmul.f32 %v575, %v20
  %v638 = vmul.f32 %v579, %v21
  %v639 = vmul.f32 %v583, %v22
  %v640 = vmul.f32 %v587, %v23
  %v641 = vmul.f32 %v591, %v24
  %v642 = vmul.f32 %v595, %v25
  %v643 = vmul.f32 %v599, %v26
  %v644 = vmul.f32 %v603, %v27
  %v645 = vmul.f32 %v607, %v28
  %v646 = vmul.f32 %v611, %v29
  %v647 = vmul.f32 %v615, %v30
  %v648 = vmul.f32 %v619, %v31
  %v649 = vmul.f32 %v623, %v32
  %v650 = vmul.f32 %v627, %v33
  %v651 = vmul.f32 %v631, %v34
  %v652 = vmul.f32 %v635, %v35
  %653 = vst.msk [vmem:[%s5] sm:$0xff] %vm36, %v637
  %654 = vst.msk [vmem:[%s5 + $0x8] sm:$0xff] %vm36, %v638
  %655 = vst.msk [vmem:[%s5 + $0x10] sm:$0xff] %vm36, %v639
  %656 = vst.msk [vmem:[%s5 + $0x18] sm:$0xff] %vm36, %v640
  %657 = vst.msk [vmem:[%s5 + $0x20] sm:$0xff] %vm36, %v641
  %658 = vst.msk [vmem:[%s5 + $0x28] sm:$0xff] %vm36, %v642
  %659 = vst.msk [vmem:[%s5 + $0x30] sm:$0xff] %vm36, %v643
  %660 = vst.msk [vmem:[%s5 + $0x38] sm:$0xff] %vm36, %v644
  %661 = vst.msk [vmem:[%s5 + $0x40] sm:$0xff] %vm36, %v645
  %662 = vst.msk [vmem:[%s5 + $0x48] sm:$0xff] %vm36, %v646
  %663 = vst.msk [vmem:[%s5 + $0x50] sm:$0xff] %vm36, %v647
  %664 = vst.msk [vmem:[%s5 + $0x58] sm:$0xff] %vm36, %v648
  %665 = vst.msk [vmem:[%s5 + $0x60] sm:$0xff] %vm36, %v649
  %666 = vst.msk [vmem:[%s5 + $0x68] sm:$0xff] %vm36, %v650
  %667 = vst.msk [vmem:[%s5 + $0x70] sm:$0xff] %vm36, %v651
  %668 = vst.msk [vmem:[%s5 + $0x78] sm:$0xff] %vm36, %v652
  // Predicated region
  $region22: #{tpu_custom_call.1} parent=0 // pred_check
    _
  $region23: #{tpu_custom_call.1} parent=0 // pred_check_branch
    %670 = sbr.rel (0) target = $region25
  $region24: #{tpu_custom_call.1} parent=0 // pred_region
    _
  $region25: #{tpu_custom_call.1} parent=0 // pred_fallthru
    _
  // Predicated region
  $region26: #{tpu_custom_call.1} parent=0 // pred_check
    _
  $region27: #{tpu_custom_call.1} parent=0 // pred_check_branch
    %672 = sbr.rel (0) target = $region29
  $region28: #{tpu_custom_call.1} parent=0 // pred_region
    _
  $region29: #{tpu_custom_call.1} parent=0 // pred_fallthru
    _

</llo_original>
